<compile_context>
chip_gen: v6e
topology: v6e:2x2x1
jax: 0.10.0
libtpu: 0.0.40
codegen_flags: <defaults>
</compile_context>

<pallas_src>
import functools

import jax
import jax.numpy as jnp
from jax.experimental import pallas as pl
from jax.experimental.pallas import tpu as pltpu

LN_EPS = 1e-5      # torch.nn.LayerNorm default
SUBLANE = 8


def _round_up(x, m):
    return (x + m - 1) // m * m


def _fc_kernel(x_ref, w1_ref, w2_ref, p_ref, o_ref, *, n_model, ff_pad):
    x = x_ref[...]                                            # (tr, n_model) f32

    # Folded small params: row 0 = b1 (ff_pad wide), rows 1..3 = b2/gamma/beta
    # (n_model wide, zero beyond).
    p = p_ref[...]
    b1 = p[0:1, :ff_pad]
    b2 = p[1:2, :n_model]
    gamma = p[2:3, :n_model]
    beta = p[3:4, :n_model]

    # first Linear + ReLU (MXU, f32 accumulate).  Padded w1 cols / b1 entries
    # are zero, so padded h columns are relu(0) = 0 and contribute nothing.
    h = jnp.dot(x, w1_ref[...], preferred_element_type=jnp.float32)
    h = jnp.maximum(h + b1, 0.0)                              # (tr, ff_pad)

    # second Linear + bias + residual
    y = jnp.dot(h, w2_ref[...], preferred_element_type=jnp.float32)
    z = y + b2 + x                                            # (tr, n_model)

    # LayerNorm, two-pass form (matches torch, no cancellation issue).
    mean = jnp.mean(z, axis=-1, keepdims=True)
    zc = z - mean
    var = jnp.mean(zc * zc, axis=-1, keepdims=True)
    inv = jax.lax.rsqrt(var + LN_EPS)
    o_ref[...] = zc * inv * gamma + beta


def prepare_params(w1, b1, w2, b2, gamma, beta):
    """One-time prep (call at init, not per forward): transpose PyTorch Linear
    weights (out, in) -> (in, out), cast to f32, sublane-pad ff_dim to a
    multiple of 8, and fold the four small vectors into one resident array."""
    ff_dim, n_model = w1.shape
    ff_pad = _round_up(ff_dim, SUBLANE)
    pwidth = max(ff_pad, n_model)

    w1_t = jnp.zeros((n_model, ff_pad), jnp.float32)
    w1_t = w1_t.at[:, :ff_dim].set(jnp.transpose(w1).astype(jnp.float32))
    w2_t = jnp.zeros((ff_pad, n_model), jnp.float32)
    w2_t = w2_t.at[:ff_dim, :].set(jnp.transpose(w2).astype(jnp.float32))

    p = jnp.zeros((4, pwidth), jnp.float32)
    p = p.at[0, :ff_dim].set(b1.astype(jnp.float32))
    p = p.at[1, :n_model].set(b2.astype(jnp.float32))
    p = p.at[2, :n_model].set(gamma.astype(jnp.float32))
    p = p.at[3, :n_model].set(beta.astype(jnp.float32))

    return (w1_t, w2_t, p)


def fully_connected(x, params, *, row_tile=2048):
    """x: (batch, seq, n_model) float32; params from prepare_params()."""
    w1_t, w2_t, p = params
    n_model, ff_pad = w1_t.shape
    batch, seq, nm = x.shape
    assert nm == n_model
    rows = batch * seq

    # Row tile: multiple of 8, capped so the parallel grid has >= 2 steps
    # (keeps both v7x TensorCores busy).  No row padding; ragged last block is
    # masked by Pallas on writeback.
    tr = min(row_tile, _round_up(rows, SUBLANE))
    if rows > SUBLANE:
        tr = min(tr, _round_up((rows + 1) // 2, SUBLANE))
    tr = max(tr, SUBLANE)
    grid = (pl.cdiv(rows, tr),)

    x2d = x.reshape(rows, n_model).astype(jnp.float32)   # free view / no-op cast

    kernel = functools.partial(_fc_kernel, n_model=n_model, ff_pad=ff_pad)

    flops = rows * (4 * n_model * ff_pad + 10 * n_model)
    bytes_accessed = 4 * (2 * rows * n_model            # x in, out
                          + 2 * n_model * ff_pad        # w1, w2 (resident)
                          + 4 * p.shape[1])             # folded params

    out2d = pl.pallas_call(
        kernel,
        out_shape=jax.ShapeDtypeStruct((rows, n_model), jnp.float32),
        grid_spec=pltpu.PrefetchScalarGridSpec(
            num_scalar_prefetch=0,
            grid=grid,
            in_specs=[
                pl.BlockSpec((tr, n_model), lambda i: (i, 0)),       # x tile
                pl.BlockSpec((n_model, ff_pad), lambda i: (0, 0)),   # w1 (resident)
                pl.BlockSpec((ff_pad, n_model), lambda i: (0, 0)),   # w2 (resident)
                pl.BlockSpec(p.shape, lambda i: (0, 0)),             # b1/b2/gamma/beta
            ],
            out_specs=pl.BlockSpec((tr, n_model), lambda i: (i, 0)),
        ),
        compiler_params=pltpu.CompilerParams(
            dimension_semantics=("parallel",),          # megacore on v7x
            vmem_limit_bytes=32 * 1024 * 1024,          # safe on v5e/v6e/v7x
        ),
        cost_estimate=pl.CostEstimate(
            flops=flops, transcendentals=rows, bytes_accessed=bytes_accessed),
    )(x2d, w1_t, w2_t, p)

    return out2d.reshape(batch, seq, n_model)


def _reference(x, w1, b1, w2, b2, gamma, beta):
    h = jnp.maximum(jnp.einsum("bld,fd->blf", x, w1) + b1, 0.0)
    y = jnp.einsum("blf,df->bld", h, w2) + b2
    z = y + x
    mean = jnp.mean(z, axis=-1, keepdims=True)
    var = jnp.mean((z - mean) ** 2, axis=-1, keepdims=True)
    return (z - mean) / jnp.sqrt(var + LN_EPS) * gamma + beta


if __name__ == "__main__":
    # TransConfig-like: n_model=32, ff_dim=50, bias=True, residual=True
    batch, seq, n_model, ff_dim = 2, 8, 32, 50

    key = jax.random.PRNGKey(0)
    kx, kw1, kb1, kw2, kb2 = jax.random.split(key, 5)

    x = jax.random.normal(kx, (batch, seq, n_model), dtype=jnp.float32)

    # Deterministic params (PyTorch Linear-style uniform bounds).
    bound1 = 1.0 / jnp.sqrt(jnp.float32(n_model))
    bound2 = 1.0 / jnp.sqrt(jnp.float32(ff_dim))
    w1 = jax.random.uniform(kw1, (ff_dim, n_model), jnp.float32, -bound1, bound1)
    b1 = jax.random.uniform(kb1, (ff_dim,), jnp.float32, -bound1, bound1)
    w2 = jax.random.uniform(kw2, (n_model, ff_dim), jnp.float32, -bound2, bound2)
    b2 = jax.random.uniform(kb2, (n_model,), jnp.float32, -bound2, bound2)
    gamma = jnp.ones((n_model,), jnp.float32)
    beta = jnp.zeros((n_model,), jnp.float32)

    # One-time weight prep (hoisted out of the per-call path), jitted apply.
    params = jax.tree_util.tree_map(jax.block_until_ready,
                                    prepare_params(w1, b1, w2, b2, gamma, beta))
    apply_fn = jax.jit(fully_connected)

    out = apply_fn(x, params)
    out = jax.block_until_ready(out)

    ref = _reference(x, w1, b1, w2, b2, gamma, beta)
    assert out.shape == (batch, seq, n_model)
    assert jnp.allclose(out, ref, atol=1e-4, rtol=1e-4), "mismatch vs reference"

    print("KERNEL_OK")
</pallas_src>

<mosaic_0001>
module attributes {stable_mosaic.version = 11 : i64} {
  func.func @_fc_kernel(%arg0: i32, %arg1: memref<8x32xf32, #tpu.memory_space<vmem>>, %arg2: memref<32x56xf32, #tpu.memory_space<vmem>>, %arg3: memref<56x32xf32, #tpu.memory_space<vmem>>, %arg4: memref<4x56xf32, #tpu.memory_space<vmem>>, %arg5: memref<8x32xf32, #tpu.memory_space<vmem>>) attributes {dimension_semantics = [#tpu.dimension_semantics<parallel>], iteration_bounds = array<i64: 2>, scalar_prefetch = 0 : i64, scratch_operands = 0 : i64, tpu.core_type = #tpu.core_type<tc>, window_params = [{transform_indices = @transform_0, window_bounds = array<i64: 8, 32>}, {pipeline_mode = #tpu.pipeline_mode<synchronous>, transform_indices = @transform_1, window_bounds = array<i64: 32, 56>}, {pipeline_mode = #tpu.pipeline_mode<synchronous>, transform_indices = @transform_2, window_bounds = array<i64: 56, 32>}, {pipeline_mode = #tpu.pipeline_mode<synchronous>, transform_indices = @transform_3, window_bounds = array<i64: 4, 56>}, {transform_indices = @transform_4, window_bounds = array<i64: 8, 32>}]} {
    %c0 = arith.constant 0 : index
    %c0_0 = arith.constant 0 : index
    %0 = vector.load %arg1[%c0, %c0_0] : memref<8x32xf32, #tpu.memory_space<vmem>>, vector<8x32xf32>
    %c0_1 = arith.constant 0 : index
    %c0_2 = arith.constant 0 : index
    %1 = vector.load %arg4[%c0_1, %c0_2] : memref<4x56xf32, #tpu.memory_space<vmem>>, vector<4x56xf32>
    %2 = vector.extract_strided_slice %1 {offsets = [0, 0], sizes = [1, 56], strides = [1, 1]} : vector<4x56xf32> to vector<1x56xf32>
    %3 = vector.extract_strided_slice %1 {offsets = [1, 0], sizes = [1, 32], strides = [1, 1]} : vector<4x56xf32> to vector<1x32xf32>
    %4 = vector.extract_strided_slice %1 {offsets = [2, 0], sizes = [1, 32], strides = [1, 1]} : vector<4x56xf32> to vector<1x32xf32>
    %5 = vector.extract_strided_slice %1 {offsets = [3, 0], sizes = [1, 32], strides = [1, 1]} : vector<4x56xf32> to vector<1x32xf32>
    %c0_3 = arith.constant 0 : index
    %c0_4 = arith.constant 0 : index
    %6 = vector.load %arg2[%c0_3, %c0_4] : memref<32x56xf32, #tpu.memory_space<vmem>>, vector<32x56xf32>
    %cst = arith.constant dense<0.000000e+00> : vector<8x56xf32>
    %7 = tpu.matmul %0, %6, %cst {dimension_numbers = #tpu.dot_dimension_numbers<[1], [0], [0], [1], [0, 0, 1, 1], [], []>} : vector<8x32xf32>, vector<32x56xf32>, vector<8x56xf32> -> vector<8x56xf32>
    %8 = vector.broadcast %2 : vector<1x56xf32> to vector<8x56xf32>
    %9 = arith.addf %7, %8 : vector<8x56xf32>
    %cst_5 = arith.constant 0.000000e+00 : f32
    %10 = vector.broadcast %cst_5 : f32 to vector<8x56xf32>
    %11 = arith.maximumf %9, %10 : vector<8x56xf32>
    %c0_6 = arith.constant 0 : index
    %c0_7 = arith.constant 0 : index
    %12 = vector.load %arg3[%c0_6, %c0_7] : memref<56x32xf32, #tpu.memory_space<vmem>>, vector<56x32xf32>
    %cst_8 = arith.constant dense<0.000000e+00> : vector<8x32xf32>
    %13 = tpu.matmul %11, %12, %cst_8 {dimension_numbers = #tpu.dot_dimension_numbers<[1], [0], [0], [1], [0, 0, 1, 1], [], []>} : vector<8x56xf32>, vector<56x32xf32>, vector<8x32xf32> -> vector<8x32xf32>
    %14 = vector.broadcast %3 : vector<1x32xf32> to vector<8x32xf32>
    %15 = arith.addf %13, %14 : vector<8x32xf32>
    %16 = arith.addf %15, %0 : vector<8x32xf32>
    %cst_9 = arith.constant dense<0.000000e+00> : vector<8xf32>
    %17 = vector.multi_reduction <add>, %16, %cst_9 [1] : vector<8x32xf32> to vector<8xf32>
    %18 = vector.shape_cast %17 : vector<8xf32> to vector<8x1xf32>
    %cst_10 = arith.constant 3.200000e+01 : f32
    %19 = vector.broadcast %cst_10 : f32 to vector<8x1xf32>
    %20 = arith.divf %18, %19 : vector<8x1xf32>
    %21 = vector.broadcast %20 : vector<8x1xf32> to vector<8x32xf32>
    %22 = arith.subf %16, %21 : vector<8x32xf32>
    %23 = arith.mulf %22, %22 : vector<8x32xf32>
    %cst_11 = arith.constant dense<0.000000e+00> : vector<8xf32>
    %24 = vector.multi_reduction <add>, %23, %cst_11 [1] : vector<8x32xf32> to vector<8xf32>
    %25 = vector.shape_cast %24 : vector<8xf32> to vector<8x1xf32>
    %cst_12 = arith.constant 3.200000e+01 : f32
    %26 = vector.broadcast %cst_12 : f32 to vector<8x1xf32>
    %27 = arith.divf %25, %26 : vector<8x1xf32>
    %cst_13 = arith.constant 9.99999974E-6 : f32
    %28 = vector.broadcast %cst_13 : f32 to vector<8x1xf32>
    %29 = arith.addf %27, %28 : vector<8x1xf32>
    %30 = math.rsqrt %29 : vector<8x1xf32>
    %31 = vector.broadcast %30 : vector<8x1xf32> to vector<8x32xf32>
    %32 = arith.mulf %22, %31 : vector<8x32xf32>
    %33 = vector.broadcast %4 : vector<1x32xf32> to vector<8x32xf32>
    %34 = arith.mulf %32, %33 : vector<8x32xf32>
    %35 = vector.broadcast %5 : vector<1x32xf32> to vector<8x32xf32>
    %36 = arith.addf %34, %35 : vector<8x32xf32>
    %c0_14 = arith.constant 0 : index
    %c0_15 = arith.constant 0 : index
    %37 = vector.load %arg5[%c0_14, %c0_15] : memref<8x32xf32, #tpu.memory_space<vmem>>, vector<8x32xf32>
    tpu.vector_store %arg5[%c0_14, %c0_15], %36 {strides = array<i32>} : memref<8x32xf32, #tpu.memory_space<vmem>>, vector<8x32xf32>,
    return
  }
  func.func @transform_0(%arg0: i32) -> (i32, i32) {
    %c0_i32 = arith.constant 0 : i32
    %c0_i32_0 = arith.constant 0 : i32
    return %arg0, %c0_i32 : i32, i32
  }
  func.func @transform_1(%arg0: i32) -> (i32, i32) {
    %c0_i32 = arith.constant 0 : i32
    %c0_i32_0 = arith.constant 0 : i32
    %c0_i32_1 = arith.constant 0 : i32
    return %c0_i32, %c0_i32_0 : i32, i32
  }
  func.func @transform_2(%arg0: i32) -> (i32, i32) {
    %c0_i32 = arith.constant 0 : i32
    %c0_i32_0 = arith.constant 0 : i32
    %c0_i32_1 = arith.constant 0 : i32
    return %c0_i32, %c0_i32_0 : i32, i32
  }
  func.func @transform_3(%arg0: i32) -> (i32, i32) {
    %c0_i32 = arith.constant 0 : i32
    %c0_i32_0 = arith.constant 0 : i32
    %c0_i32_1 = arith.constant 0 : i32
    return %c0_i32, %c0_i32_0 : i32, i32
  }
  func.func @transform_4(%arg0: i32) -> (i32, i32) {
    %c0_i32 = arith.constant 0 : i32
    %c0_i32_0 = arith.constant 0 : i32
    return %arg0, %c0_i32 : i32, i32
  }
}

</mosaic_0001>

<llo_original>
// kernel: fully_connected.1
$region0: #{fully_connected.1}
  #allocation0 [shape = 'u32[]', space=smem, size = 0x4, offset = 0x4, fixed_abs, tag = 'smem constant byte address 0x4 - core index']
  #allocation1 [shape = 'u32[144,128]{1,0:T(1,128)}', space=vmem, size = 0x12000, scoped, tag = 'internal scratch']
  %s0 = inlined_call_operand.vmem [shape: f32[16,32], index: 0, kind: input, shape index: {}]
  %s1 = inlined_call_operand.vmem [shape: f32[32,56], index: 1, kind: input, shape index: {}]
  %s2 = inlined_call_operand.vmem [shape: f32[56,32], index: 2, kind: input, shape index: {}]
  %s3 = inlined_call_operand.vmem [shape: f32[4,56], index: 3, kind: input, shape index: {}]
  %s4 = inlined_call_operand.hbm [shape: f32[16,32], index: 4, kind: output, shape index: {}]
  %s5 = sld [smem:[#allocation0]]
  $region49: #{fully_connected.1} parent=0
    _
  %s7 = ssub.s32 1, %s5
  %s8 = scalar_select 0, %s7, %s5
  $region1: #{fully_connected.1} parent=0
    #allocation2 [shape = 'u8[8192]{0}', space=vmem, size = 0x2000, scoped, tag = 'output window, operand 0']
    #allocation3 [shape = 's32[2]{0}', space=sflag, size = 0x8, scoped, tag = 'scoped memory for fully_connected.1']
    %9 = vsyncpa [#allocation3], 0
    %s10 = scalar_lea.sflag [#allocation3], 1
    %11 = vsyncpa %s10, 0
    loop: start=0, step=1, limit=4
    $region2: #{fully_connected.1} parent=1 // loop_pre_header
      _
    $region3: #{fully_connected.1} parent=1 // loop_header
      %s13 = sphi 0, %s17
      %p14 = scmp.ge.s32.totalorder %s13, 4
      %s23 = sphi 0, %s25
      %s26 = sphi 0, %s23
      %s27 = sphi 0, %s26
      %s43 = sphi 0, %s27
      %s47 = sphi 0, %s47
      %s49 = sphi 0, %s47
      %s50 = sphi 0, %s49
      %s64 = sphi 0, %s50
      %s68 = sphi 0, %s68
      %s70 = sphi 0, %s68
      %s71 = sphi 0, %s70
      %s85 = sphi 0, %s71
      %s89 = sphi 0, %s89
      %s91 = sphi 0, %s89
      %s92 = sphi 0, %s91
      %s106 = sphi 0, %s92
      %s112 = sphi 0, %s114
      %s115 = sphi 0, %s112
      %s116 = sphi 0, %s115
      %s132 = sphi 0, %s116
    $region4: #{fully_connected.1} parent=1 // loop_header_branch
      %16 = sbr.rel (%p14) target = $region8
    $region5: #{fully_connected.1} parent=1 // loop_body
      %s18 = ssub.s32 %s13, 1
      %s19 = ssub.s32 %s13, 2
      %s20 = sadd.s32 %s13, 1
      %s21 = ssub.s32 %s13, %s20
      %p22 = scmp.eq.s32.totalorder %s21, 0
      %s24 = sadd.s32 %s23, 1
      %s25 = scalar_select %p22, %s23, %s24
      %p28 = pneg %p22
      %p29 = scmp.eq.s32.totalorder %s13, 1
      %p30 = por %p28, %p29
      %p31 = scmp.ne.s32.totalorder %s23, %s26
      %p32 = scmp.eq.s32.totalorder %s13, 0
      %p33 = por %p31, %p32
      %p34 = scmp.ne.s32.totalorder %s23, %s26
      %p35 = scmp.eq.s32.totalorder %s18, 1
      %p36 = por %p34, %p35
      %p37 = scmp.ne.s32.totalorder %s26, %s27
      %p38 = scmp.eq.s32.totalorder %s18, 0
      %p39 = por %p37, %p38
      %p40 = scmp.ne.s32.totalorder %s26, %s27
      %p41 = scmp.eq.s32.totalorder %s19, 1
      %p42 = por %p40, %p41
      %p44 = scmp.ne.s32.totalorder %s27, %s43
      %p45 = scmp.eq.s32.totalorder %s19, 0
      %p46 = por %p44, %p45
      %s48 = sadd.s32 %s47, 1
      %p51 = scmp.eq.s32.totalorder %s13, 1
      %p52 = scmp.ne.s32.totalorder %s47, %s49
      %p53 = scmp.eq.s32.totalorder %s13, 0
      %p54 = por %p52, %p53
      %p55 = scmp.ne.s32.totalorder %s47, %s49
      %p56 = scmp.eq.s32.totalorder %s18, 1
      %p57 = por %p55, %p56
      %p58 = scmp.ne.s32.totalorder %s49, %s50
      %p59 = scmp.eq.s32.totalorder %s18, 0
      %p60 = por %p58, %p59
      %p61 = scmp.ne.s32.totalorder %s49, %s50
      %p62 = scmp.eq.s32.totalorder %s19, 1
      %p63 = por %p61, %p62
      %p65 = scmp.ne.s32.totalorder %s50, %s64
      %p66 = scmp.eq.s32.totalorder %s19, 0
      %p67 = por %p65, %p66
      %s69 = sadd.s32 %s68, 1
      %p72 = scmp.eq.s32.totalorder %s13, 1
      %p73 = scmp.ne.s32.totalorder %s68, %s70
      %p74 = scmp.eq.s32.totalorder %s13, 0
      %p75 = por %p73, %p74
      %p76 = scmp.ne.s32.totalorder %s68, %s70
      %p77 = scmp.eq.s32.totalorder %s18, 1
      %p78 = por %p76, %p77
      %p79 = scmp.ne.s32.totalorder %s70, %s71
      %p80 = scmp.eq.s32.totalorder %s18, 0
      %p81 = por %p79, %p80
      %p82 = scmp.ne.s32.totalorder %s70, %s71
      %p83 = scmp.eq.s32.totalorder %s19, 1
      %p84 = por %p82, %p83
      %p86 = scmp.ne.s32.totalorder %s71, %s85
      %p87 = scmp.eq.s32.totalorder %s19, 0
      %p88 = por %p86, %p87
      %s90 = sadd.s32 %s89, 1
      %p93 = scmp.eq.s32.totalorder %s13, 1
      %p94 = scmp.ne.s32.totalorder %s89, %s91
      %p95 = scmp.eq.s32.totalorder %s13, 0
      %p96 = por %p94, %p95
      %p97 = scmp.ne.s32.totalorder %s89, %s91
      %p98 = scmp.eq.s32.totalorder %s18, 1
      %p99 = por %p97, %p98
      %p100 = scmp.ne.s32.totalorder %s91, %s92
      %p101 = scmp.eq.s32.totalorder %s18, 0
      %p102 = por %p100, %p101
      %p103 = scmp.ne.s32.totalorder %s91, %s92
      %p104 = scmp.eq.s32.totalorder %s19, 1
      %p105 = por %p103, %p104
      %p107 = scmp.ne.s32.totalorder %s92, %s106
      %p108 = scmp.eq.s32.totalorder %s19, 0
      %p109 = por %p107, %p108
      %s110 = ssub.s32 %s13, %s20
      %p111 = scmp.eq.s32.totalorder %s110, 0
      %s113 = sadd.s32 %s112, 1
      %s114 = scalar_select %p111, %s112, %s113
      %p117 = pneg %p111
      %p118 = scmp.eq.s32.totalorder %s13, 1
      %p119 = por %p117, %p118
      %p120 = scmp.ne.s32.totalorder %s112, %s115
      %p121 = scmp.eq.s32.totalorder %s13, 0
      %p122 = por %p120, %p121
      %p123 = scmp.ne.s32.totalorder %s112, %s115
      %p124 = scmp.eq.s32.totalorder %s18, 1
      %p125 = por %p123, %p124
      %p126 = scmp.ne.s32.totalorder %s115, %s116
      %p127 = scmp.eq.s32.totalorder %s18, 0
      %p128 = por %p126, %p127
      %p129 = scmp.ne.s32.totalorder %s115, %s116
      %p130 = scmp.eq.s32.totalorder %s19, 1
      %p131 = por %p129, %p130
      %p133 = scmp.ne.s32.totalorder %s116, %s132
      %p134 = scmp.eq.s32.totalorder %s19, 0
      %p135 = por %p133, %p134
      %p136 = scmp.le.s32.totalorder 1, %s13
      %p137 = scmp.lt.s32.totalorder %s13, 3
      %p138 = pnand %p136, %p137
      %p139 = pneg %p138
      // Predicated region
      $region9: #{fully_connected.1} parent=5 // pred_check
        _
      $region10: #{fully_connected.1} parent=5 // pred_check_branch
        %141 = sbr.rel (%p138) target = $region12
      $region11: #{fully_connected.1} parent=5 // pred_region
        %s142 = ssub.s32 %s13, 1
        // Predicated region
        $region13: #{fully_connected.1} parent=11 // pred_check
          %p143 = pneg %p60
        $region14: #{fully_connected.1} parent=11 // pred_check_branch
          %145 = sbr.rel (%p143) target = $region16
        $region15: #{fully_connected.1} parent=11 // pred_region
          _
        $region16: #{fully_connected.1} parent=11 // pred_fallthru
          _
        // Predicated region
        $region17: #{fully_connected.1} parent=11 // pred_check
          %p146 = pneg %p81
        $region18: #{fully_connected.1} parent=11 // pred_check_branch
          %148 = sbr.rel (%p146) target = $region20
        $region19: #{fully_connected.1} parent=11 // pred_region
          _
        $region20: #{fully_connected.1} parent=11 // pred_fallthru
          _
        // Predicated region
        $region21: #{fully_connected.1} parent=11 // pred_check
          %p149 = pneg %p102
        $region22: #{fully_connected.1} parent=11 // pred_check_branch
          %151 = sbr.rel (%p149) target = $region24
        $region23: #{fully_connected.1} parent=11 // pred_region
          _
        $region24: #{fully_connected.1} parent=11 // pred_fallthru
          _
      $region12: #{fully_connected.1} parent=5 // pred_fallthru
        _
      %p152 = scmp.lt.s32.totalorder %s13, 2
      // Predicated region
      $region25: #{fully_connected.1} parent=5 // pred_check
        %p153 = pneg %p152
      $region26: #{fully_connected.1} parent=5 // pred_check_branch
        %155 = sbr.rel (%p153) target = $region28
      $region27: #{fully_connected.1} parent=5 // pred_region
        // Predicated region
        $region29: #{fully_connected.1} parent=27 // pred_check
          %p156 = pneg %p33
        $region30: #{fully_connected.1} parent=27 // pred_check_branch
          %158 = sbr.rel (%p156) target = $region32
        $region31: #{fully_connected.1} parent=27 // pred_region
          %p159 = scmp.lt.s32.totalorder %s13, 1
          %s160 = scalar_select %p159, %s13, 1
          %s161 = smul.addr %s160, 8
          %s162 = scalar_lea.vmem %s0, %s161
        $region32: #{fully_connected.1} parent=27 // pred_fallthru
          _
      $region28: #{fully_connected.1} parent=5 // pred_fallthru
        _
      %p163 = scmp.le.s32.totalorder 1, %s13
      %p164 = scmp.lt.s32.totalorder %s13, 3
      %p165 = pnand %p163, %p164
      %p166 = pneg %p165
      // Predicated region
      $region33: #{fully_connected.1} parent=5 // pred_check
        _
      $region34: #{fully_connected.1} parent=5 // pred_check_branch
        %168 = sbr.rel (%p165) target = $region36
      $region35: #{fully_connected.1} parent=5 // pred_region
        %s169 = ssub.s32 %s13, 1
        %p170 = scmp.lt.s32.totalorder %s18, 1
        %s171 = scalar_select %p170, %s18, 1
        %s172 = smul.addr %s171, 8
        %s173 = scalar_lea.vmem %s0, %s172
        %p174 = pneg %p39
        %p175 = pneg %p36
        %p176 = pneg %p60
        %p177 = pneg %p57
        %p178 = pneg %p81
        %p179 = pneg %p78
        %p180 = pneg %p102
        %p181 = pneg %p99
        %p182 = pneg %p128
        %p183 = pneg %p125
        %s184 = sand.u32 %s115, 1
        %s185 = scalar_lea.sflag [#allocation3], %s184
        %s186 = sand.u32 %s115, 1
        %s187 = smul.addr %s186, 8
        %s188 = scalar_lea.vmem [#allocation2], %s187
        %p189 = scmp.lt.s32.totalorder %s18, 1
        %s190 = scalar_select %p189, %s18, 1
        %s191 = smul.addr %s190, 8
        %s192 = scalar_lea.vmem %s0, %s191
        %v193 = vld [vmem:[%s192] sm:$0xff]
        %v194 = vld [vmem:[%s3] sm:$0xf]
        %v195 = vld [vmem:[%s1] sm:$0xff]
        %v196 = vld [vmem:[%s1 + $0x8] sm:$0xff]
        %v197 = vld [vmem:[%s1 + $0x10] sm:$0xff]
        %v198 = vld [vmem:[%s1 + $0x18] sm:$0xff]
        %v199 = vlaneseq
        %v200 = vshrl.u32 %v199, 7
        %v201 = vsub.s32 0, %v200
        %v202 = vrot.slane %v194, %v201
        %vm203 = vcmask 261120
        %v205 = vsel %vm203, %v193, 0
        %207 = vmatprep.subr.mxu0 0.0
        %208 = vmatpush1.msra.mxu0 0.0
        %209 = vmatprep.subr.mxu0 0.0
        %210 = vmatpush1.msra.mxu0 0.0
        %211 = vmatprep.subr.mxu0 0.0
        %212 = vmatpush1.msra.mxu0 0.0
        %213 = vmatprep.subr.mxu0 0.0
        %214 = vmatpush1.msra.mxu0 0.0
        %215 = vmatprep.subr.mxu0 0.0
        %216 = vmatpush1.msra.mxu0 0.0
        %217 = vmatprep.subr.mxu0 0.0
        %218 = vmatpush1.msra.mxu0 0.0
        %219 = vmatprep.subr.mxu0 0.0
        %220 = vmatpush1.msra.mxu0 0.0
        %221 = vmatprep.subr.mxu0 0.0
        %222 = vmatpush1.msra.mxu0 0.0
        %223 = vmatprep.subr.mxu0 0.0
        %224 = vmatpush1.msra.mxu0 0.0
        %225 = vmatprep.subr.mxu0 0.0
        %226 = vmatpush1.msra.mxu0 0.0
        %227 = vmatprep.subr.mxu0 0.0
        %228 = vmatpush1.msra.mxu0 0.0
        %229 = vmatprep.subr.mxu0 0.0
        %230 = vmatpush1.msra.mxu0 0.0
        %231 = vmatprep.subr.mxu0 0.0
        %232 = vmatpush1.msra.mxu0 %v198
        %233 = vmatprep.subr.mxu0 0.0
        %234 = vmatpush1.msra.mxu0 %v197
        %235 = vmatprep.subr.mxu0 0.0
        %236 = vmatpush1.msra.mxu0 %v196
        %237 = vmatprep.subr.mxu0 0.0
        %238 = vmatpush1.msra.mxu0 %v195
        %239 = vmatprep.subr.mxu0 0.0
        %240 = vmatpush2.msra.mxu0 0.0
        %241 = vmatprep.subr.mxu0 0.0
        %242 = vmatpush2.msra.mxu0 0.0
        %243 = vmatprep.subr.mxu0 0.0
        %244 = vmatpush2.msra.mxu0 0.0
        %245 = vmatprep.subr.mxu0 0.0
        %246 = vmatpush2.msra.mxu0 0.0
        %247 = vmatprep.subr.mxu0 0.0
        %248 = vmatpush2.msra.mxu0 0.0
        %249 = vmatprep.subr.mxu0 0.0
        %250 = vmatpush2.msra.mxu0 0.0
        %251 = vmatprep.subr.mxu0 0.0
        %252 = vmatpush2.msra.mxu0 0.0
        %253 = vmatprep.subr.mxu0 0.0
        %254 = vmatpush2.msra.mxu0 0.0
        %255 = vmatprep.subr.mxu0 0.0
        %256 = vmatpush2.msra.mxu0 0.0
        %257 = vmatprep.subr.mxu0 0.0
        %258 = vmatpush2.msra.mxu0 0.0
        %259 = vmatprep.subr.mxu0 0.0
        %260 = vmatpush2.msra.mxu0 0.0
        %261 = vmatprep.subr.mxu0 0.0
        %262 = vmatpush2.msra.mxu0 0.0
        %263 = vmatprep.subr.mxu0 0.0
        %264 = vmatpush2.msra.mxu0 0.0
        %265 = vmatprep.subr.mxu0 0.0
        %266 = vmatpush2.msra.mxu0 0.0
        %267 = vmatprep.subr.mxu0 0.0
        %268 = vmatpush2.msra.mxu0 0.0
        %269 = vmatprep.subr.mxu0 0.0
        %270 = vmatpush2.msra.mxu0 0.0
        %271 = vmatprep.mubr.f32.mxu0 0.0
        %272 = vmatmul.mubr.f32.gmra.mxu0 %v205
        %v273 = vpop.f32.mrf.mxu0
        %v274 = vadd.f32 %v202, %v273
        %v275 = vpop.f32.mrf.mxu0
        %276 = vdwg.mxu0
        %v277 = vmax.f32 %v274, 0.0
        %v278 = vld [vmem:[%s2] sm:$0xff]
        %v279 = vld [vmem:[%s2 + $0x8] sm:$0xff]
        %v280 = vld [vmem:[%s2 + $0x10] sm:$0xff]
        %v281 = vld [vmem:[%s2 + $0x18] sm:$0xff]
        %v282 = vld [vmem:[%s2 + $0x20] sm:$0xff]
        %v283 = vld [vmem:[%s2 + $0x28] sm:$0xff]
        %v284 = vld [vmem:[%s2 + $0x30] sm:$0xff]
        %v285 = vlaneseq
        %v286 = vshrl.u32 %v285, 7
        %v287 = vsub.s32 1, %v286
        %v288 = vrot.slane %v194, %v287
        %vm289 = vcmask 457728
        %v291 = vsel %vm289, %v277, 0
        %293 = vmatprep.subr.mxu0 0.0
        %294 = vmatpush1.msra.mxu0 0.0
        %295 = vmatprep.subr.mxu0 0.0
        %296 = vmatpush1.msra.mxu0 0.0
        %297 = vmatprep.subr.mxu0 0.0
        %298 = vmatpush1.msra.mxu0 0.0
        %299 = vmatprep.subr.mxu0 0.0
        %300 = vmatpush1.msra.mxu0 0.0
        %301 = vmatprep.subr.mxu0 0.0
        %302 = vmatpush1.msra.mxu0 0.0
        %303 = vmatprep.subr.mxu0 0.0
        %304 = vmatpush1.msra.mxu0 0.0
        %305 = vmatprep.subr.mxu0 0.0
        %306 = vmatpush1.msra.mxu0 0.0
        %307 = vmatprep.subr.mxu0 0.0
        %308 = vmatpush1.msra.mxu0 0.0
        %309 = vmatprep.subr.mxu0 0.0
        %310 = vmatpush1.msra.mxu0 0.0
        %311 = vmatprep.subr.mxu0 0.0
        %312 = vmatpush1.msra.mxu0 %v284
        %313 = vmatprep.subr.mxu0 0.0
        %314 = vmatpush1.msra.mxu0 %v283
        %315 = vmatprep.subr.mxu0 0.0
        %316 = vmatpush1.msra.mxu0 %v282
        %317 = vmatprep.subr.mxu0 0.0
        %318 = vmatpush1.msra.mxu0 %v281
        %319 = vmatprep.subr.mxu0 0.0
        %320 = vmatpush1.msra.mxu0 %v280
        %321 = vmatprep.subr.mxu0 0.0
        %322 = vmatpush1.msra.mxu0 %v279
        %323 = vmatprep.subr.mxu0 0.0
        %324 = vmatpush1.msra.mxu0 %v278
        %325 = vmatprep.subr.mxu0 0.0
        %326 = vmatpush2.msra.mxu0 0.0
        %327 = vmatprep.subr.mxu0 0.0
        %328 = vmatpush2.msra.mxu0 0.0
        %329 = vmatprep.subr.mxu0 0.0
        %330 = vmatpush2.msra.mxu0 0.0
        %331 = vmatprep.subr.mxu0 0.0
        %332 = vmatpush2.msra.mxu0 0.0
        %333 = vmatprep.subr.mxu0 0.0
        %334 = vmatpush2.msra.mxu0 0.0
        %335 = vmatprep.subr.mxu0 0.0
        %336 = vmatpush2.msra.mxu0 0.0
        %337 = vmatprep.subr.mxu0 0.0
        %338 = vmatpush2.msra.mxu0 0.0
        %339 = vmatprep.subr.mxu0 0.0
        %340 = vmatpush2.msra.mxu0 0.0
        %341 = vmatprep.subr.mxu0 0.0
        %342 = vmatpush2.msra.mxu0 0.0
        %343 = vmatprep.subr.mxu0 0.0
        %344 = vmatpush2.msra.mxu0 0.0
        %345 = vmatprep.subr.mxu0 0.0
        %346 = vmatpush2.msra.mxu0 0.0
        %347 = vmatprep.subr.mxu0 0.0
        %348 = vmatpush2.msra.mxu0 0.0
        %349 = vmatprep.subr.mxu0 0.0
        %350 = vmatpush2.msra.mxu0 0.0
        %351 = vmatprep.subr.mxu0 0.0
        %352 = vmatpush2.msra.mxu0 0.0
        %353 = vmatprep.subr.mxu0 0.0
        %354 = vmatpush2.msra.mxu0 0.0
        %355 = vmatprep.subr.mxu0 0.0
        %356 = vmatpush2.msra.mxu0 0.0
        %357 = vmatprep.mubr.f32.mxu0 0.0
        %358 = vmatmul.mubr.f32.gmra.mxu0 %v291
        %v359 = vpop.f32.mrf.mxu0
        %v360 = vadd.f32 %v288, %v359
        %v361 = vpop.f32.mrf.mxu0
        %362 = vdwg.mxu0
        %v363 = vadd.f32 %v360, %v193
        %v364 = vsel %vm203, %v363, 0.0
        %365 = vadd.xlane.f32.xlu0 %v364
        %v366 = vpop.xlane.xlu0 %365
        %v367 = vrcp.pop 32.0
        %v368 = vmul.f32 %v366, %v367
        %v369 = vsub.f32 %v363, %v368
        %v370 = vmul.f32 %v369, %v369
        %v371 = vsel %vm203, %v370, 0.0
        %372 = vadd.xlane.f32.xlu0 %v371
        %v373 = vpop.xlane.xlu0 %372
        %v374 = vmul.f32 %v373, %v367
        %v375 = vadd.f32 %v374, 1e-05
        %v376 = vrsqrt.pop %v375
        %v377 = vmul.f32 %v369, %v376
        %v378 = vlaneseq
        %v379 = vshrl.u32 %v378, 7
        %v380 = vsub.s32 2, %v379
        %v381 = vrot.slane %v194, %v380
        %v382 = vmul.f32 %v377, %v381
        %v383 = vlaneseq
        %v384 = vshrl.u32 %v383, 7
        %v385 = vsub.s32 3, %v384
        %v386 = vrot.slane %v194, %v385
        %v387 = vadd.f32 %v382, %v386
        %388 = vst.msk [vmem:[%s188] sm:$0xff] %vm203, %v387
        %s389 = sand.u32 %s115, 1
        %s390 = scalar_lea.sflag [#allocation3], %s389
        %s391 = sand.u32 %s115, 1
        %s392 = smul.addr %s391, 8
        %s393 = scalar_lea.vmem [#allocation2], %s392
        // Predicated region
        $region37: #{fully_connected.1} parent=35 // pred_check
          %p394 = pneg %p125
        $region38: #{fully_connected.1} parent=35 // pred_check_branch
          %396 = sbr.rel (%p394) target = $region40
        $region39: #{fully_connected.1} parent=35 // pred_region
          %s398 = ssub.s32 128, 128
          %399 = vsyncadd %s390, %s398
          %s400 = smul.addr %s18, 128
          %s401 = scalar_lea.hbm %s4, %s400
          %s403 = sshll.u32 %s393, 4
          %s404 = int_to_ptr.vmem [resolvable:$true] %s403
          %406 = dma.vmem_to_hbm [thread:$0]  %s404, 128, %s401, %s390
        $region40: #{fully_connected.1} parent=35 // pred_fallthru
          _
      $region36: #{fully_connected.1} parent=5 // pred_fallthru
        _
      %p407 = scmp.le.s32.totalorder 2, %s13
      // Predicated region
      $region41: #{fully_connected.1} parent=5 // pred_check
        %p408 = pneg %p407
      $region42: #{fully_connected.1} parent=5 // pred_check_branch
        %410 = sbr.rel (%p408) target = $region44
      $region43: #{fully_connected.1} parent=5 // pred_region
        %s411 = ssub.s32 %s13, 2
        // Predicated region
        $region45: #{fully_connected.1} parent=43 // pred_check
          %p412 = pneg %p131
        $region46: #{fully_connected.1} parent=43 // pred_check_branch
          %414 = sbr.rel (%p412) target = $region48
        $region47: #{fully_connected.1} parent=43 // pred_region
          %s415 = sand.u32 %s116, 1
          %s416 = scalar_lea.sflag [#allocation3], %s415
          %s417 = sand.u32 %s116, 1
          %s418 = smul.addr %s417, 8
          %s419 = scalar_lea.vmem [#allocation2], %s418
          %420 = dma.done %s416, 128
        $region48: #{fully_connected.1} parent=43 // pred_fallthru
          _
      $region44: #{fully_connected.1} parent=5 // pred_fallthru
        _
    $region6: #{fully_connected.1} parent=1 // loop_footer
      %s17 = sadd.s32 1, %s13
    $region7: #{fully_connected.1} parent=1 // loop_footer_branch
      %12 = sbr.rel target = $region3
    $region8: #{fully_connected.1} parent=1 // loop_exit
      _
    %421 = vsyncpa [#allocation3], 1
    %s422 = scalar_lea.sflag [#allocation3], 1
    %423 = vsyncpa %s422, 1

</llo_original>
